<compile_context>
chip_gen: v5e
topology: v5e:2x2
jax: 0.10.0
libtpu: 0.0.40
codegen_flags: <defaults>
</compile_context>

<pallas_src>
import functools

import jax
import jax.numpy as jnp
from jax import lax
from jax.experimental import pallas as pl
from jax.experimental.pallas import tpu as pltpu

# Fixed "parameters" of the module (used by the pure-JAX reference).
KERNEL_X = ((-1.0, 0.0, 1.0), (-2.0, 0.0, 2.0), (-1.0, 0.0, 1.0))
KERNEL_Y = ((1.0, 2.0, 1.0), (0.0, 0.0, 0.0), (-1.0, -2.0, -1.0))


def _sobelxy_kernel(x_ref, o_ref, *, W: int, G: int):
    """x_ref / o_ref: (Bt, Hf, L) with L = G*W; each lane row packs G image rows."""
    Bt, Hf, L = x_ref.shape
    x = x_ref[...].astype(jnp.float32)  # cast at the VMEM boundary, not in HBM

    zrow = jnp.zeros((Bt, 1, L), jnp.float32)

    def shift_dn(a):  # folded row f+1 (zeros below the last folded row)
        return jnp.concatenate([a[:, 1:, :], zrow], axis=1) if Hf > 1 else zrow

    def shift_up(a):  # folded row f-1 (zeros above the first folded row)
        return jnp.concatenate([zrow, a[:, :-1, :]], axis=1) if Hf > 1 else zrow

    lane = lax.broadcasted_iota(jnp.int32, (1, 1, L), 2)  # tiny, broadcast later

    # Image rows r-1 / r+1 in the folded layout; pieces that fall off the image stay
    # zero, reproducing conv2d's padding=1 semantics.
    if G > 1:
        a_dn = pltpu.roll(x, L - W, axis=2)   # value at lane l+W (segment g+1), cyclic
        a_up = pltpu.roll(x, W, axis=2)       # value at lane l-W (segment g-1), cyclic
        # Lanes in the last/first W-wide segment must take their value from the
        # next/previous folded row instead of the cyclic wrap.
        x_rp1 = jnp.where(lane >= L - W, shift_dn(a_dn), a_dn)   # image row r+1
        x_rm1 = jnp.where(lane < W, shift_up(a_up), a_up)        # image row r-1
    else:
        x_rp1 = shift_dn(x)
        x_rm1 = shift_up(x)

    # Separable vertical pass.
    s = x_rm1 + x_rp1 + 2.0 * x      # smoothing  -> feeds sobel-x
    d = x_rm1 - x_rp1                # difference -> feeds sobel-y

    # Horizontal pass: columns j+-1 inside each W-wide lane segment, zero at the
    # image's left/right edges (masks are (1,1,L) and broadcast over the block).
    col = lane % W
    at_left_edge = col == 0
    at_right_edge = col == (W - 1)

    def right(a):  # a[..., j+1]
        return jnp.where(at_right_edge, 0.0, pltpu.roll(a, L - 1, axis=2))

    def left(a):   # a[..., j-1]
        return jnp.where(at_left_edge, 0.0, pltpu.roll(a, 1, axis=2))

    gx = right(s) - left(s)                  # == F.conv2d(x, Kx, padding=1)
    gy = left(d) + right(d) + 2.0 * d        # == F.conv2d(x, Ky, padding=1)
    o_ref[...] = (jnp.abs(gx) + jnp.abs(gy)).astype(o_ref.dtype)


def _physical_vmem_bytes() -> int:
    try:
        info = pltpu.get_tpu_info()
        v = getattr(info, "vmem_capacity_bytes", None)
        if v:
            return int(v)
    except Exception:
        pass
    return 64 * 1024 * 1024  # conservative default: v7x per-TensorCore VMEM


def _choose_fold(H: int, W: int) -> int:
    """Number of image rows folded onto the lane axis (lane width L = G*W)."""
    if W >= 128:
        return 1
    divs = [g for g in range(1, H + 1) if H % g == 0]
    for g in divs:  # best: lane width a multiple of 128 AND 8-aligned sublane dim
        if (g * W) % 128 == 0 and (H // g) % 8 == 0:
            return g
    for g in divs:  # next: lane width a multiple of 128 (unmasked vst's)
        if (g * W) % 128 == 0:
            return g
    for g in divs:  # fallback: first divisor reaching >= 128 lanes
        if g * W >= 128:
            return g
    return divs[-1]


def _choose_batch_tile(N: int, per_image_io_bytes: int, io_budget: int) -> int:
    """Images per grid step: fill the per-block I/O budget, keep >= 2 grid steps."""
    bt = max(1, io_budget // max(per_image_io_bytes, 1))
    bt = min(bt, N)
    if N >= 2:
        bt = min(bt, pl.cdiv(N, 2))  # >= 2 parallel steps -> both TCs / megacore
    return int(bt)


def sobelxy(x):
    """x: (N, 1, H, W) -> |conv2d(x,Kx,pad=1)| + |conv2d(x,Ky,pad=1)| (Sobelxy.forward)."""
    N, C, H, W = x.shape
    assert C == 1, "F.conv2d with a (1,1,3,3) weight requires a single input channel"

    in_dtype = x.dtype
    out_dtype = in_dtype if jnp.issubdtype(in_dtype, jnp.floating) else jnp.float32
    in_item = jnp.dtype(in_dtype).itemsize
    out_item = jnp.dtype(out_dtype).itemsize

    G = _choose_fold(H, W)
    Hf, L = H // G, G * W
    xr = x.reshape(N, Hf, L)  # contiguous reshape: metadata only, no HBM rewrite

    vmem_phys = _physical_vmem_bytes()
    io_budget = (2 << 20) if vmem_phys <= (64 << 20) else (3 << 20)
    per_image_io = Hf * L * (in_item + out_item)
    Bt = _choose_batch_tile(N, per_image_io, io_budget)
    num_blocks = pl.cdiv(N, Bt)

    # Honest VMEM footprint: double-buffered in/out + ~8 live f32 block temporaries.
    block_elems = Bt * Hf * L
    footprint = block_elems * (2 * in_item + 2 * out_item + 8 * 4)
    cp = dict(dimension_semantics=("parallel",))
    if footprint > (12 << 20):
        # Large (whole-image) blocks: raise scoped VMEM but stay well inside the
        # chip's physical VMEM (<= 32 MiB on v7x's 64 MiB/TC parts).
        # TODO(synk): H-band halo tiling when even this cap is insufficient.
        cp["vmem_limit_bytes"] = int(min(max(footprint, 16 << 20), vmem_phys // 2))

    out = pl.pallas_call(
        functools.partial(_sobelxy_kernel, W=W, G=G),
        out_shape=jax.ShapeDtypeStruct((N, Hf, L), out_dtype),
        grid=(num_blocks,),
        in_specs=[pl.BlockSpec((Bt, Hf, L), lambda n: (n, 0, 0))],
        out_specs=pl.BlockSpec((Bt, Hf, L), lambda n: (n, 0, 0)),
        compiler_params=pltpu.CompilerParams(**cp),
    )(xr)
    return out.reshape(N, C, H, W)


def sobelxy_reference(x):
    """Pure-JAX reference via lax.conv_general_dilated (matches F.conv2d)."""
    xf = x.astype(jnp.float32)
    wx = jnp.array(KERNEL_X, jnp.float32)[None, None]  # (1,1,3,3) OIHW
    wy = jnp.array(KERNEL_Y, jnp.float32)[None, None]
    dn = lax.conv_dimension_numbers(xf.shape, wx.shape, ("NCHW", "OIHW", "NCHW"))
    cx = lax.conv_general_dilated(xf, wx, (1, 1), ((1, 1), (1, 1)), dimension_numbers=dn)
    cy = lax.conv_general_dilated(xf, wy, (1, 1), ((1, 1), (1, 1)), dimension_numbers=dn)
    return jnp.abs(cx) + jnp.abs(cy)


if __name__ == "__main__":
    key = jax.random.PRNGKey(0)

    # Folded path: (2,1,16,16) -> G=8, block lanes = 128, grid=(2,).
    x = jax.random.normal(key, (2, 1, 16, 16), dtype=jnp.float32)
    out = jax.block_until_ready(sobelxy(x))
    ref = jax.block_until_ready(sobelxy_reference(x))
    assert out.shape == ref.shape == (2, 1, 16, 16)
    assert jnp.allclose(out, ref, atol=1e-4, rtol=1e-5), "mismatch vs JAX conv reference"

    # Already lane-dense (G=1) path.
    x2 = jax.random.normal(jax.random.PRNGKey(1), (2, 1, 8, 128), dtype=jnp.float32)
    out2 = jax.block_until_ready(sobelxy(x2))
    ref2 = jax.block_until_ready(sobelxy_reference(x2))
    assert jnp.allclose(out2, ref2, atol=1e-4, rtol=1e-5), "mismatch (G=1 path)"

    # Ragged batch: N=3 with Bt=2 -> grid=cdiv(3,2)=2, last block partially out of bounds.
    x3 = jax.random.normal(jax.random.PRNGKey(2), (3, 1, 16, 16), dtype=jnp.float32)
    out3 = jax.block_until_ready(sobelxy(x3))
    ref3 = jax.block_until_ready(sobelxy_reference(x3))
    assert jnp.allclose(out3, ref3, atol=1e-4, rtol=1e-5), "mismatch (ragged batch path)"

    print("KERNEL_OK")
</pallas_src>

<mosaic_0001>
module attributes {stable_mosaic.version = 11 : i64} {
  func.func @_sobelxy_kernel(%arg0: i32, %arg1: memref<1x2x128xf32, #tpu.memory_space<vmem>>, %arg2: memref<1x2x128xf32, #tpu.memory_space<vmem>>) attributes {dimension_semantics = [#tpu.dimension_semantics<parallel>], iteration_bounds = array<i64: 2>, scalar_prefetch = 0 : i64, scratch_operands = 0 : i64, tpu.core_type = #tpu.core_type<tc>, window_params = [{transform_indices = @transform_0, window_bounds = array<i64: 1, 2, 128>}, {transform_indices = @transform_1, window_bounds = array<i64: 1, 2, 128>}]} {
    %c0 = arith.constant 0 : index
    %c0_0 = arith.constant 0 : index
    %c0_1 = arith.constant 0 : index
    %0 = vector.load %arg1[%c0, %c0_0, %c0_1] : memref<1x2x128xf32, #tpu.memory_space<vmem>>, vector<1x2x128xf32>
    %cst = arith.constant 0.000000e+00 : f32
    %1 = vector.broadcast %cst : f32 to vector<1x1x128xf32>
    %2 = tpu.iota {dimensions = array<i32: 2>} : vector<1x1x128xi32>
    %c112_i32 = arith.constant 112 : i32
    %3 = tpu.dynamic_rotate %0 by %c112_i32 dim 2 : vector<1x2x128xf32>, i32 -> vector<1x2x128xf32>
    %c16_i32 = arith.constant 16 : i32
    %4 = tpu.dynamic_rotate %0 by %c16_i32 dim 2 : vector<1x2x128xf32>, i32 -> vector<1x2x128xf32>
    %c112_i32_2 = arith.constant 112 : i32
    %5 = vector.broadcast %c112_i32_2 : i32 to vector<1x1x128xi32>
    %6 = arith.cmpi sge, %2, %5 : vector<1x1x128xi32>
    %7 = vector.extract_strided_slice %3 {offsets = [0, 1, 0], sizes = [1, 1, 128], strides = [1, 1, 1]} : vector<1x2x128xf32> to vector<1x1x128xf32>
    %8 = tpu.concatenate %7, %1 in 1 : vector<1x1x128xf32>, vector<1x1x128xf32> -> vector<1x2x128xf32>
    %9 = vector.shape_cast %6 : vector<1x1x128xi1> to vector<1x1x128xi1>
    %10 = vector.broadcast %9 : vector<1x1x128xi1> to vector<1x2x128xi1>
    %11 = arith.select %10, %8, %3 : vector<1x2x128xi1>, vector<1x2x128xf32>
    %c16_i32_3 = arith.constant 16 : i32
    %12 = vector.broadcast %c16_i32_3 : i32 to vector<1x1x128xi32>
    %13 = arith.cmpi slt, %2, %12 : vector<1x1x128xi32>
    %14 = vector.extract_strided_slice %4 {offsets = [0, 0, 0], sizes = [1, 1, 128], strides = [1, 1, 1]} : vector<1x2x128xf32> to vector<1x1x128xf32>
    %15 = tpu.concatenate %1, %14 in 1 : vector<1x1x128xf32>, vector<1x1x128xf32> -> vector<1x2x128xf32>
    %16 = vector.shape_cast %13 : vector<1x1x128xi1> to vector<1x1x128xi1>
    %17 = vector.broadcast %16 : vector<1x1x128xi1> to vector<1x2x128xi1>
    %18 = arith.select %17, %15, %4 : vector<1x2x128xi1>, vector<1x2x128xf32>
    %19 = arith.addf %18, %11 : vector<1x2x128xf32>
    %cst_4 = arith.constant 2.000000e+00 : f32
    %20 = vector.broadcast %cst_4 : f32 to vector<1x2x128xf32>
    %21 = arith.mulf %20, %0 : vector<1x2x128xf32>
    %22 = arith.addf %19, %21 : vector<1x2x128xf32>
    %23 = arith.subf %18, %11 : vector<1x2x128xf32>
    %c16_i32_5 = arith.constant 16 : i32
    %c0_i32 = arith.constant 0 : i32
    %24 = arith.cmpi eq, %c16_i32_5, %c0_i32 : i32
    %c1_i32 = arith.constant 1 : i32
    %25 = arith.select %24, %c1_i32, %c16_i32_5 : i32
    %26 = vector.broadcast %25 : i32 to vector<1x1x128xi32>
    %27 = arith.remsi %2, %26 : vector<1x1x128xi32>
    %c0_i32_6 = arith.constant 0 : i32
    %28 = vector.broadcast %c0_i32_6 : i32 to vector<1x1x128xi32>
    %29 = arith.cmpi ne, %27, %28 : vector<1x1x128xi32>
    %c0_i32_7 = arith.constant 0 : i32
    %30 = vector.broadcast %c0_i32_7 : i32 to vector<1x1x128xi32>
    %31 = arith.cmpi slt, %27, %30 : vector<1x1x128xi32>
    %c0_i32_8 = arith.constant 0 : i32
    %32 = arith.cmpi slt, %25, %c0_i32_8 : i32
    %33 = vector.broadcast %32 : i1 to vector<1x1x128xi1>
    %34 = vector.broadcast %33 : vector<1x1x128xi1> to vector<1x1x128xi1>
    %35 = arith.xori %31, %34 : vector<1x1x128xi1>
    %36 = arith.andi %35, %29 : vector<1x1x128xi1>
    %37 = vector.broadcast %25 : i32 to vector<1x1x128xi32>
    %38 = arith.addi %27, %37 : vector<1x1x128xi32>
    %39 = arith.select %36, %38, %27 : vector<1x1x128xi1>, vector<1x1x128xi32>
    %c0_i32_9 = arith.constant 0 : i32
    %40 = vector.broadcast %c0_i32_9 : i32 to vector<1x1x128xi32>
    %41 = arith.cmpi eq, %39, %40 : vector<1x1x128xi32>
    %c15_i32 = arith.constant 15 : i32
    %42 = vector.broadcast %c15_i32 : i32 to vector<1x1x128xi32>
    %43 = arith.cmpi eq, %39, %42 : vector<1x1x128xi32>
    %c127_i32 = arith.constant 127 : i32
    %44 = tpu.dynamic_rotate %22 by %c127_i32 dim 2 : vector<1x2x128xf32>, i32 -> vector<1x2x128xf32>
    %cst_10 = arith.constant 0.000000e+00 : f32
    %45 = vector.shape_cast %43 : vector<1x1x128xi1> to vector<1x1x128xi1>
    %46 = vector.broadcast %45 : vector<1x1x128xi1> to vector<1x2x128xi1>
    %47 = vector.broadcast %cst_10 : f32 to vector<1x2x128xf32>
    %48 = arith.select %46, %47, %44 : vector<1x2x128xi1>, vector<1x2x128xf32>
    %c1_i32_11 = arith.constant 1 : i32
    %49 = tpu.dynamic_rotate %22 by %c1_i32_11 dim 2 : vector<1x2x128xf32>, i32 -> vector<1x2x128xf32>
    %cst_12 = arith.constant 0.000000e+00 : f32
    %50 = vector.shape_cast %41 : vector<1x1x128xi1> to vector<1x1x128xi1>
    %51 = vector.broadcast %50 : vector<1x1x128xi1> to vector<1x2x128xi1>
    %52 = vector.broadcast %cst_12 : f32 to vector<1x2x128xf32>
    %53 = arith.select %51, %52, %49 : vector<1x2x128xi1>, vector<1x2x128xf32>
    %54 = arith.subf %48, %53 : vector<1x2x128xf32>
    %c1_i32_13 = arith.constant 1 : i32
    %55 = tpu.dynamic_rotate %23 by %c1_i32_13 dim 2 : vector<1x2x128xf32>, i32 -> vector<1x2x128xf32>
    %cst_14 = arith.constant 0.000000e+00 : f32
    %56 = vector.shape_cast %41 : vector<1x1x128xi1> to vector<1x1x128xi1>
    %57 = vector.broadcast %56 : vector<1x1x128xi1> to vector<1x2x128xi1>
    %58 = vector.broadcast %cst_14 : f32 to vector<1x2x128xf32>
    %59 = arith.select %57, %58, %55 : vector<1x2x128xi1>, vector<1x2x128xf32>
    %c127_i32_15 = arith.constant 127 : i32
    %60 = tpu.dynamic_rotate %23 by %c127_i32_15 dim 2 : vector<1x2x128xf32>, i32 -> vector<1x2x128xf32>
    %cst_16 = arith.constant 0.000000e+00 : f32
    %61 = vector.shape_cast %43 : vector<1x1x128xi1> to vector<1x1x128xi1>
    %62 = vector.broadcast %61 : vector<1x1x128xi1> to vector<1x2x128xi1>
    %63 = vector.broadcast %cst_16 : f32 to vector<1x2x128xf32>
    %64 = arith.select %62, %63, %60 : vector<1x2x128xi1>, vector<1x2x128xf32>
    %65 = arith.addf %59, %64 : vector<1x2x128xf32>
    %cst_17 = arith.constant 2.000000e+00 : f32
    %66 = vector.broadcast %cst_17 : f32 to vector<1x2x128xf32>
    %67 = arith.mulf %66, %23 : vector<1x2x128xf32>
    %68 = arith.addf %65, %67 : vector<1x2x128xf32>
    %69 = math.absf %54 : vector<1x2x128xf32>
    %70 = math.absf %68 : vector<1x2x128xf32>
    %71 = arith.addf %69, %70 : vector<1x2x128xf32>
    %c0_18 = arith.constant 0 : index
    %c0_19 = arith.constant 0 : index
    %c0_20 = arith.constant 0 : index
    %72 = vector.load %arg2[%c0_18, %c0_19, %c0_20] : memref<1x2x128xf32, #tpu.memory_space<vmem>>, vector<1x2x128xf32>
    tpu.vector_store %arg2[%c0_18, %c0_19, %c0_20], %71 {strides = array<i32>} : memref<1x2x128xf32, #tpu.memory_space<vmem>>, vector<1x2x128xf32>,
    return
  }
  func.func @transform_0(%arg0: i32) -> (i32, i32, i32) {
    %c0_i32 = arith.constant 0 : i32
    %c0_i32_0 = arith.constant 0 : i32
    %c0_i32_1 = arith.constant 0 : i32
    return %arg0, %c0_i32, %c0_i32_0 : i32, i32, i32
  }
  func.func @transform_1(%arg0: i32) -> (i32, i32, i32) {
    %c0_i32 = arith.constant 0 : i32
    %c0_i32_0 = arith.constant 0 : i32
    %c0_i32_1 = arith.constant 0 : i32
    return %arg0, %c0_i32, %c0_i32_0 : i32, i32, i32
  }
}

</mosaic_0001>

<llo_original>
// kernel: tpu_custom_call.1
$region0: #{tpu_custom_call.1}
  #allocation0 [shape = 'u32[]', space=smem, size = 0x4, offset = 0x4, fixed_abs, tag = 'smem constant byte address 0x4 - core index']
  #allocation1 [shape = 'u32[72,128]{1,0:T(1,128)}', space=vmem, size = 0x9000, scoped, tag = 'internal scratch']
  %s0 = inlined_call_operand.hbm [shape: f32[2,2,128], index: 0, kind: input, shape index: {}]
  %s1 = inlined_call_operand.hbm [shape: f32[2,2,128], index: 1, kind: output, shape index: {}]
  %s2 = sld [smem:[#allocation0]]
  $region41: #{tpu_custom_call.1} parent=0
    _
  %s4 = ssub.s32 1, %s2
  %s5 = scalar_select 0, %s4, %s2
  $region1: #{tpu_custom_call.1} parent=0
    #allocation2 [shape = 'u8[2048]{0}', space=vmem, size = 0x800, scoped, tag = 'input window, operand 0']
    #allocation3 [shape = 's32[2]{0}', space=sflag, size = 0x8, scoped, tag = 'scoped memory for tpu_custom_call.1']
    #allocation4 [shape = 's32[2]{0}', space=sflag, size = 0x8, scoped, tag = 'scoped memory for tpu_custom_call.1']
    #allocation5 [shape = 'u8[2048]{0}', space=vmem, size = 0x800, scoped, tag = 'output window, operand 0']
    %6 = vsyncpa [#allocation3], 0
    %s7 = scalar_lea.sflag [#allocation3], 1
    %8 = vsyncpa %s7, 0
    %9 = vsyncpa [#allocation4], 0
    %s10 = scalar_lea.sflag [#allocation4], 1
    %11 = vsyncpa %s10, 0
    loop: start=0, step=1, limit=4
    $region2: #{tpu_custom_call.1} parent=1 // loop_pre_header
      _
    $region3: #{tpu_custom_call.1} parent=1 // loop_header
      %s13 = sphi 0, %s17
      %p14 = scmp.ge.s32.totalorder %s13, 4
      %s23 = sphi 0, %s25
      %s26 = sphi 0, %s23
      %s27 = sphi 0, %s26
      %s43 = sphi 0, %s27
      %s49 = sphi 0, %s51
      %s52 = sphi 0, %s49
      %s53 = sphi 0, %s52
      %s69 = sphi 0, %s53
    $region4: #{tpu_custom_call.1} parent=1 // loop_header_branch
      %16 = sbr.rel (%p14) target = $region8
    $region5: #{tpu_custom_call.1} parent=1 // loop_body
      %s18 = ssub.s32 %s13, 1
      %s19 = ssub.s32 %s13, 2
      %s20 = sadd.s32 %s13, 1
      %s21 = ssub.s32 %s13, %s20
      %p22 = scmp.eq.s32.totalorder %s21, 0
      %s24 = sadd.s32 %s23, 1
      %s25 = scalar_select %p22, %s23, %s24
      %p28 = pneg %p22
      %p29 = scmp.eq.s32.totalorder %s13, 1
      %p30 = por %p28, %p29
      %p31 = scmp.ne.s32.totalorder %s23, %s26
      %p32 = scmp.eq.s32.totalorder %s13, 0
      %p33 = por %p31, %p32
      %p34 = scmp.ne.s32.totalorder %s23, %s26
      %p35 = scmp.eq.s32.totalorder %s18, 1
      %p36 = por %p34, %p35
      %p37 = scmp.ne.s32.totalorder %s26, %s27
      %p38 = scmp.eq.s32.totalorder %s18, 0
      %p39 = por %p37, %p38
      %p40 = scmp.ne.s32.totalorder %s26, %s27
      %p41 = scmp.eq.s32.totalorder %s19, 1
      %p42 = por %p40, %p41
      %p44 = scmp.ne.s32.totalorder %s27, %s43
      %p45 = scmp.eq.s32.totalorder %s19, 0
      %p46 = por %p44, %p45
      %s47 = ssub.s32 %s13, %s20
      %p48 = scmp.eq.s32.totalorder %s47, 0
      %s50 = sadd.s32 %s49, 1
      %s51 = scalar_select %p48, %s49, %s50
      %p54 = pneg %p48
      %p55 = scmp.eq.s32.totalorder %s13, 1
      %p56 = por %p54, %p55
      %p57 = scmp.ne.s32.totalorder %s49, %s52
      %p58 = scmp.eq.s32.totalorder %s13, 0
      %p59 = por %p57, %p58
      %p60 = scmp.ne.s32.totalorder %s49, %s52
      %p61 = scmp.eq.s32.totalorder %s18, 1
      %p62 = por %p60, %p61
      %p63 = scmp.ne.s32.totalorder %s52, %s53
      %p64 = scmp.eq.s32.totalorder %s18, 0
      %p65 = por %p63, %p64
      %p66 = scmp.ne.s32.totalorder %s52, %s53
      %p67 = scmp.eq.s32.totalorder %s19, 1
      %p68 = por %p66, %p67
      %p70 = scmp.ne.s32.totalorder %s53, %s69
      %p71 = scmp.eq.s32.totalorder %s19, 0
      %p72 = por %p70, %p71
      %p73 = scmp.le.s32.totalorder 1, %s13
      %p74 = scmp.lt.s32.totalorder %s13, 3
      %p75 = pnand %p73, %p74
      %p76 = pneg %p75
      // Predicated region
      $region9: #{tpu_custom_call.1} parent=5 // pred_check
        _
      $region10: #{tpu_custom_call.1} parent=5 // pred_check_branch
        %78 = sbr.rel (%p75) target = $region12
      $region11: #{tpu_custom_call.1} parent=5 // pred_region
        %s79 = ssub.s32 %s13, 1
      $region12: #{tpu_custom_call.1} parent=5 // pred_fallthru
        _
      %p80 = scmp.lt.s32.totalorder %s13, 2
      // Predicated region
      $region13: #{tpu_custom_call.1} parent=5 // pred_check
        %p81 = pneg %p80
      $region14: #{tpu_custom_call.1} parent=5 // pred_check_branch
        %83 = sbr.rel (%p81) target = $region16
      $region15: #{tpu_custom_call.1} parent=5 // pred_region
        // Predicated region
        $region17: #{tpu_custom_call.1} parent=15 // pred_check
          %p84 = pneg %p33
        $region18: #{tpu_custom_call.1} parent=15 // pred_check_branch
          %86 = sbr.rel (%p84) target = $region20
        $region19: #{tpu_custom_call.1} parent=15 // pred_region
          %s87 = sand.u32 %s23, 1
          %s88 = scalar_lea.sflag [#allocation3], %s87
          %s89 = sand.u32 %s23, 1
          %s90 = smul.addr %s89, 2
          %s91 = scalar_lea.vmem [#allocation2], %s90
          %93 = vsyncadd %s88, 0
          %s94 = smul.addr %s13, 2
          %s95 = scalar_lea.hbm %s0, %s94
          %s97 = sshll.u32 %s95, 4
          %s98 = int_to_ptr.hbm [resolvable:$true] %s97
          %s99 = sshll.u32 %s91, 4
          %s100 = int_to_ptr.vmem [resolvable:$true] %s99
          %102 = dma.hbm_to_vmem [thread:$0]  %s98, 32, %s100, %s88
        $region20: #{tpu_custom_call.1} parent=15 // pred_fallthru
          _
      $region16: #{tpu_custom_call.1} parent=5 // pred_fallthru
        _
      %p103 = scmp.le.s32.totalorder 1, %s13
      %p104 = scmp.lt.s32.totalorder %s13, 3
      %p105 = pnand %p103, %p104
      %p106 = pneg %p105
      // Predicated region
      $region21: #{tpu_custom_call.1} parent=5 // pred_check
        _
      $region22: #{tpu_custom_call.1} parent=5 // pred_check_branch
        %108 = sbr.rel (%p105) target = $region24
      $region23: #{tpu_custom_call.1} parent=5 // pred_region
        %s109 = ssub.s32 %s13, 1
        %s110 = sand.u32 %s26, 1
        %s111 = scalar_lea.sflag [#allocation3], %s110
        %s112 = sand.u32 %s26, 1
        %s113 = smul.addr %s112, 2
        %s114 = scalar_lea.vmem [#allocation2], %s113
        // Predicated region
        $region25: #{tpu_custom_call.1} parent=23 // pred_check
          %p115 = pneg %p39
        $region26: #{tpu_custom_call.1} parent=23 // pred_check_branch
          %117 = sbr.rel (%p115) target = $region28
        $region27: #{tpu_custom_call.1} parent=23 // pred_region
          %119 = dma.done %s111, 32
        $region28: #{tpu_custom_call.1} parent=23 // pred_fallthru
          _
        %s120 = sand.u32 %s26, 1
        %s121 = scalar_lea.sflag [#allocation3], %s120
        %s122 = sand.u32 %s26, 1
        %s123 = smul.addr %s122, 2
        %s124 = scalar_lea.vmem [#allocation2], %s123
        %p125 = pneg %p39
        %p126 = pneg %p36
        %p127 = pneg %p65
        %p128 = pneg %p62
        %s129 = sand.u32 %s52, 1
        %s130 = scalar_lea.sflag [#allocation4], %s129
        %s131 = sand.u32 %s52, 1
        %s132 = smul.addr %s131, 2
        %s133 = scalar_lea.vmem [#allocation5], %s132
        %v134 = vld [vmem:[%s114] sm:$0x3]
        %v135 = vlaneseq
        %v136 = vand.u32 %v135, 127
        %137 = vrot.lane.b32.xlu0 %v134, 112
        %v138 = vpop.permute.xlu0 %137
        %139 = vrot.lane.b32.xlu0 %v134, 16
        %v140 = vpop.permute.xlu0 %139
        %vm141 = vcmp.ge.s32.totalorder %v136, 112
        %v143 = vrot.slane %v138, 1
        %vm145 = vcmask 1040384
        %v146 = vsel %vm145, %v143, 0.0
        %v147 = vsel %vm141, 1, 0
        %vm148 = vcmp.eq.s32.totalorder %v147, 1
        %v149 = vsel %vm148, %v146, %v138
        %vm150 = vcmp.lt.s32.totalorder %v136, 16
        %v152 = vrot.slane %v140, 7
        %v154 = vsel %vm145, 0.0, %v152
        %v155 = vsel %vm150, 1, 0
        %vm156 = vcmp.eq.s32.totalorder %v155, 1
        %v157 = vsel %vm156, %v154, %v140
        %v158 = vadd.f32 %v157, %v149
        %v159 = vmul.f32 %v134, 2.0
        %v160 = vadd.f32 %v158, %v159
        %v161 = vsub.f32 %v157, %v149
        %vm162 = vcmp.lt.s32.totalorder %v136, 0
        %v163 = vsub.s32 0, %v136
        %v164 = vsel %vm162, %v163, %v136
        %v165 = vshrl.u32 %v164, 4
        %v166 = vand.u32 %v164, 15
        %v167 = vsub.s32 0, %v166
        %v168 = vsel %vm162, %v167, %v166
        %vm169 = vcmp.ne.s32.totalorder %v168, 0
        %vm170 = vcmp.lt.s32.totalorder %v168, 0
        %vm171 = vmand %vm170, %vm169
        %v172 = vadd.s32 %v168, 16
        %v173 = vsel %vm171, %v172, %v168
        %vm174 = vcmp.eq.s32.totalorder %v173, 0
        %vm175 = vcmp.eq.s32.totalorder %v173, 15
        %176 = vrot.lane.b32.xlu0 %v160, 127
        %v177 = vpop.permute.xlu0 %176
        %v178 = vsel %vm175, 1, 0
        %vm179 = vcmp.eq.s32.totalorder %v178, 1
        %v180 = vsel %vm179, 0.0, %v177
        %181 = vrot.lane.b32.xlu0 %v160, 1
        %v182 = vpop.permute.xlu0 %181
        %v183 = vsel %vm174, 1, 0
        %vm184 = vcmp.eq.s32.totalorder %v183, 1
        %v185 = vsel %vm184, 0.0, %v182
        %v186 = vsub.f32 %v180, %v185
        %187 = vrot.lane.b32.xlu0 %v161, 1
        %v188 = vpop.permute.xlu0 %187
        %v189 = vsel %vm184, 0.0, %v188
        %190 = vrot.lane.b32.xlu0 %v161, 127
        %v191 = vpop.permute.xlu0 %190
        %v192 = vsel %vm179, 0.0, %v191
        %v193 = vadd.f32 %v189, %v192
        %v194 = vmul.f32 %v161, 2.0
        %v195 = vadd.f32 %v193, %v194
        %v196 = vand.u32 2147483647, %v186
        %v197 = vand.u32 2147483647, %v195
        %v198 = vadd.f32 %v196, %v197
        %199 = vst [vmem:[%s133] sm:$0x3] %v198
        %s200 = sand.u32 %s52, 1
        %s201 = scalar_lea.sflag [#allocation4], %s200
        %s202 = sand.u32 %s52, 1
        %s203 = smul.addr %s202, 2
        %s204 = scalar_lea.vmem [#allocation5], %s203
        // Predicated region
        $region29: #{tpu_custom_call.1} parent=23 // pred_check
          %p205 = pneg %p62
        $region30: #{tpu_custom_call.1} parent=23 // pred_check_branch
          %207 = sbr.rel (%p205) target = $region32
        $region31: #{tpu_custom_call.1} parent=23 // pred_region
          %209 = vsyncadd %s201, 0
          %s210 = smul.addr %s18, 2
          %s211 = scalar_lea.hbm %s1, %s210
          %s213 = sshll.u32 %s204, 4
          %s214 = int_to_ptr.vmem [resolvable:$true] %s213
          %s215 = sshll.u32 %s211, 4
          %s216 = int_to_ptr.hbm [resolvable:$true] %s215
          %218 = dma.vmem_to_hbm [thread:$0]  %s214, 32, %s216, %s201
        $region32: #{tpu_custom_call.1} parent=23 // pred_fallthru
          _
      $region24: #{tpu_custom_call.1} parent=5 // pred_fallthru
        _
      %p219 = scmp.le.s32.totalorder 2, %s13
      // Predicated region
      $region33: #{tpu_custom_call.1} parent=5 // pred_check
        %p220 = pneg %p219
      $region34: #{tpu_custom_call.1} parent=5 // pred_check_branch
        %222 = sbr.rel (%p220) target = $region36
      $region35: #{tpu_custom_call.1} parent=5 // pred_region
        %s223 = ssub.s32 %s13, 2
        // Predicated region
        $region37: #{tpu_custom_call.1} parent=35 // pred_check
          %p224 = pneg %p68
        $region38: #{tpu_custom_call.1} parent=35 // pred_check_branch
          %226 = sbr.rel (%p224) target = $region40
        $region39: #{tpu_custom_call.1} parent=35 // pred_region
          %s227 = sand.u32 %s53, 1
          %s228 = scalar_lea.sflag [#allocation4], %s227
          %s229 = sand.u32 %s53, 1
          %s230 = smul.addr %s229, 2
          %s231 = scalar_lea.vmem [#allocation5], %s230
          %233 = dma.done %s228, 32
        $region40: #{tpu_custom_call.1} parent=35 // pred_fallthru
          _
      $region36: #{tpu_custom_call.1} parent=5 // pred_fallthru
        _
    $region6: #{tpu_custom_call.1} parent=1 // loop_footer
      %s17 = sadd.s32 1, %s13
    $region7: #{tpu_custom_call.1} parent=1 // loop_footer_branch
      %12 = sbr.rel target = $region3
    $region8: #{tpu_custom_call.1} parent=1 // loop_exit
      _
    %234 = vsyncpa [#allocation3], 1
    %s235 = scalar_lea.sflag [#allocation3], 1
    %236 = vsyncpa %s235, 1
    %237 = vsyncpa [#allocation4], 1
    %s238 = scalar_lea.sflag [#allocation4], 1
    %239 = vsyncpa %s238, 1

</llo_original>
